<compile_context>
chip_gen: v5e
topology: v5e:2x2
jax: 0.10.0
libtpu: 0.0.40
codegen_flags: <defaults>
</compile_context>

<pallas_src>
import math
import numpy as np
import jax
import jax.numpy as jnp
from jax.experimental import pallas as pl
from jax.experimental.pallas import tpu as pltpu

NEG = -1.0e30      # finite "log(0)" surrogate; stays finite in f32 through the DP
S_PAD = 128        # padded extended-label state axis (lane dim); needs 2*L_max+1 <= 128
OUT_LANES = 128    # lane-dense NLL output block


def _pick_gb(B):
    """Rows packed per grid step (sublane groups). Bigger -> more DP ILP."""
    if B >= 64:
        return 32
    if B > 8:
        return 16
    return 8


def _pick_tt(T, t_chunk):
    """Time-chunk size. Must divide T and (be a multiple of 8 or equal T)."""
    if t_chunk is not None:
        assert T % t_chunk == 0 and (t_chunk % 8 == 0 or t_chunk == T)
        return t_chunk
    for tt in (128, 64, 32, 16, 8):
        if T % tt == 0:
            return tt
    return T


# ----------------------------------------------------------------------------
# Glue: per-batch CTC auxiliary tensors (plain numpy, not hot path)
# ----------------------------------------------------------------------------
def _build_aux(text_np, length_np, psize_np, T, B_pad, S_pad, GB):
    B = text_np.shape[0]
    NG = B_pad // GB
    ext = np.zeros((B_pad, S_pad), np.int32)            # blank-interleaved labels (blank=0)
    init_m = np.full((B_pad, S_pad), NEG, np.float32)   # additive init mask
    allow3 = np.full((B_pad, S_pad), NEG, np.float32)   # additive s-2 transition mask
    final_m = np.full((B_pad, S_pad), NEG, np.float32)  # additive final-state mask
    tb = np.ones((B_pad, 1), np.int32)                  # per-row input length (pad rows = 1)
    for b in range(B_pad):
        if b < B:
            L = int(length_np[b])
            tb[b, 0] = min(int(psize_np[b]), T)
        else:
            L = 0                                        # padded row (sliced off later)
        S = 2 * L + 1
        for i in range(L):
            ext[b, 2 * i + 1] = int(text_np[b, i])
        init_m[b, 0] = 0.0
        if S > 1:
            init_m[b, 1] = 0.0
        for s in range(2, S):
            if ext[b, s] != 0 and ext[b, s] != ext[b, s - 2]:
                allow3[b, s] = 0.0
        final_m[b, S - 1] = 0.0
        if S >= 2:
            final_m[b, S - 2] = 0.0
    gmax = tb[:, 0].reshape(NG, GB).max(axis=1).astype(np.int32)   # per-group max T
    return ext, init_m, allow3, final_m, tb, gmax


# ----------------------------------------------------------------------------
# Pallas kernel: grid (batch_group, time_chunk); per-sample NLL per group
# ----------------------------------------------------------------------------
def _make_kernel(C, S_pad, GB, Tt):
    def kernel(gmax_ref,                                   # SMEM scalar prefetch (NG,)
               preds_ref, ext_ref, init_ref, allow3_ref, final_ref, tb_ref,
               out_ref, e_ref, alpha_ref):
        g = pl.program_id(0)
        tc = pl.program_id(1)
        nt = pl.num_programs(1)
        t0 = tc * Tt
        gmax = gmax_ref[g]                                 # group's max preds_size

        # ---- emission setup for this chunk (skipped past the group's max length) ----
        @pl.when(jnp.logical_or(t0 < gmax, tc == 0))
        def _():
            x = preds_ref[...]                                          # (GB, Tt, C)
            mx = jnp.max(x, axis=-1, keepdims=True)
            xs = x - mx
            logp = xs - jnp.log(jnp.sum(jnp.exp(xs), axis=-1, keepdims=True))
            # in-kernel one-hot rebuild + batched MXU gather: E[g,t,s] = logp[g,t,ext[g,s]]
            cls = jax.lax.broadcasted_iota(jnp.int32, (GB, C, S_pad), 1)
            onehot = (cls == ext_ref[...][:, None, :]).astype(jnp.float32)
            em = jnp.einsum('gtc,gcs->gts', logp, onehot,
                            preferred_element_type=jnp.float32)         # (GB, Tt, S_pad)
            # one transpose pass to time-major so every DP step loads aligned (GB,128)
            e_ref[...] = pltpu.einshape("gts->tgs", em)                  # (Tt, GB, S_pad)

        allow3_add = allow3_ref[...]                       # (GB, S_pad)
        tb = tb_ref[...]                                   # (GB, 1) int32

        # roll wrap-around masks, hoisted out of the time loop
        lane = jax.lax.broadcasted_iota(jnp.int32, (GB, S_pad), 1)
        wrap1 = lane < 1
        wrap2 = lane < 2

        # ---- init carried alpha at the first chunk -------------------------
        @pl.when(tc == 0)
        def _():
            alpha_ref[...] = e_ref[0] + init_ref[...]

        # ---- CTC alpha recursion over this chunk, bounded by group max length ----
        lo = jnp.where(tc == 0, 1, 0).astype(jnp.int32)
        hi = jnp.clip(gmax - t0, 0, Tt).astype(jnp.int32)

        def step(t, alpha):
            a2 = jnp.where(wrap1, NEG, pltpu.roll(alpha, shift=1, axis=1))
            a3 = jnp.where(wrap2, NEG, pltpu.roll(alpha, shift=2, axis=1)) + allow3_add
            m = jnp.maximum(jnp.maximum(alpha, a2), a3)
            lse = m + jnp.log(jnp.exp(alpha - m) + jnp.exp(a2 - m) + jnp.exp(a3 - m))
            new_alpha = e_ref[t] + lse                     # aligned (GB,128) tile load
            # per-row freeze once global t >= preds_size[row]
            return jnp.where((t0 + t) < tb, new_alpha, alpha)

        alpha_ref[...] = jax.lax.fori_loop(lo, hi, step, alpha_ref[...])

        # ---- final log-likelihood over the two terminal states --------------
        @pl.when(tc == nt - 1)
        def _():
            fvals = alpha_ref[...] + final_ref[...]
            fm = jnp.max(fvals, axis=-1, keepdims=True)
            ll = fm + jnp.log(jnp.sum(jnp.exp(fvals - fm), axis=-1, keepdims=True))
            out_ref[...] = jnp.broadcast_to(-ll, (GB, OUT_LANES))   # lane-dense NLL

    return kernel


# ----------------------------------------------------------------------------
# Wrapper: group batch, chunk time, run kernel, reduce in JAX
# ----------------------------------------------------------------------------
def ctc_loss(preds, text, preds_size, length, s_pad=S_PAD, t_chunk=None):
    preds = jnp.asarray(preds, jnp.float32)
    B, T, C = preds.shape
    text_np = np.asarray(text)
    length_np = np.asarray(length)
    psize_np = np.asarray(preds_size)
    assert 2 * int(length_np.max(initial=0)) + 1 <= s_pad, "target too long for S_pad"

    GB = _pick_gb(B)
    NG = -(-B // GB)
    B_pad = NG * GB
    Tt = _pick_tt(T, t_chunk)
    NT = T // Tt

    ext, init_m, allow3, final_m, tb, gmax = _build_aux(
        text_np, length_np, psize_np, T, B_pad, s_pad, GB)

    if B_pad == B:
        preds_p = preds                                   # no extra HBM copy needed
    else:
        # TODO(synk): handle the ragged last group in-kernel instead of materializing a pad copy.
        preds_p = jnp.zeros((B_pad, T, C), jnp.float32).at[:B].set(preds)

    # VMEM budget (double-buffered inputs + scratch + matmul temporaries), with headroom.
    vmem_est = (2 * GB * Tt * C * 4            # preds chunk (x2 pipeline buffers)
                + 4 * 2 * GB * s_pad * 4       # ext/init/allow3/final blocks
                + 2 * GB * 128 * 4             # tb (lane-padded)
                + 2 * GB * OUT_LANES * 4       # output block
                + Tt * GB * s_pad * 4          # emission scratch
                + GB * s_pad * 4               # alpha carry
                + GB * C * s_pad * 4           # one-hot temp
                + 2 * GB * Tt * s_pad * 4      # em + transpose temp
                + GB * Tt * C * 4)             # logp temp
    vmem_limit = int(min(max(2 * vmem_est, 16 << 20), 56 << 20))   # stay under v7x's 64 MiB

    kernel = _make_kernel(C, s_pad, GB, Tt)

    nll = pl.pallas_call(
        kernel,
        out_shape=jax.ShapeDtypeStruct((B_pad, OUT_LANES), jnp.float32),
        grid_spec=pltpu.PrefetchScalarGridSpec(
            num_scalar_prefetch=1,                         # gmax -> SMEM
            grid=(NG, NT),
            in_specs=[
                pl.BlockSpec((GB, Tt, C), lambda g, tc, gm: (g, tc, 0)),   # preds chunk
                pl.BlockSpec((GB, s_pad), lambda g, tc, gm: (g, 0)),       # extended labels
                pl.BlockSpec((GB, s_pad), lambda g, tc, gm: (g, 0)),       # init mask
                pl.BlockSpec((GB, s_pad), lambda g, tc, gm: (g, 0)),       # s-2 transition mask
                pl.BlockSpec((GB, s_pad), lambda g, tc, gm: (g, 0)),       # final-state mask
                pl.BlockSpec((GB, 1), lambda g, tc, gm: (g, 0)),           # per-row input length
            ],
            out_specs=pl.BlockSpec((GB, OUT_LANES), lambda g, tc, gm: (g, 0)),
            scratch_shapes=[
                pltpu.VMEM((Tt, GB, s_pad), jnp.float32),   # time-major chunk emissions
                pltpu.VMEM((GB, s_pad), jnp.float32),       # carried alpha
            ]),
        compiler_params=pltpu.CompilerParams(
            dimension_semantics=("parallel", "arbitrary"),
            vmem_limit_bytes=vmem_limit),
    )(jnp.asarray(gmax), preds_p, jnp.asarray(ext), jnp.asarray(init_m),
      jnp.asarray(allow3), jnp.asarray(final_m), jnp.asarray(tb))

    nll = nll[:B, 0]
    # zero_infinity=True, then reduction='mean' (divide by target length, mean over batch)
    nll = jnp.where(jnp.logical_or(nll >= 1e29, jnp.isnan(nll)), 0.0, nll)
    per = nll / jnp.maximum(jnp.asarray(length_np, dtype=jnp.float32), 1.0)
    return jnp.mean(per)


# ----------------------------------------------------------------------------
# Pure numpy reference (mirrors torch.nn.CTCLoss(zero_infinity=True) semantics)
# ----------------------------------------------------------------------------
def reference_loss(preds, text, preds_size, length):
    preds = np.asarray(preds, np.float64)
    B, T, C = preds.shape
    m = preds.max(axis=-1, keepdims=True)
    logp = preds - m - np.log(np.exp(preds - m).sum(axis=-1, keepdims=True))
    losses = []
    for b in range(B):
        L = int(length[b]); Tb = int(preds_size[b])
        ext = [0]
        for i in range(L):
            ext += [int(text[b, i]), 0]
        S = len(ext)
        lp = logp[b]
        alpha = np.full(S, -np.inf)
        alpha[0] = lp[0, 0]
        if S > 1:
            alpha[1] = lp[0, ext[1]]
        for t in range(1, Tb):
            new = np.full(S, -np.inf)
            for s in range(S):
                cands = [alpha[s]]
                if s >= 1:
                    cands.append(alpha[s - 1])
                if s >= 2 and ext[s] != 0 and ext[s] != ext[s - 2]:
                    cands.append(alpha[s - 2])
                cm = max(cands)
                if cm == -np.inf:
                    new[s] = -np.inf
                else:
                    new[s] = lp[t, ext[s]] + cm + math.log(sum(math.exp(c - cm) for c in cands))
            alpha = new
        fin = [alpha[S - 1]] + ([alpha[S - 2]] if S >= 2 else [])
        cm = max(fin)
        ll = -np.inf if cm == -np.inf else cm + math.log(sum(math.exp(c - cm) for c in fin))
        loss_b = -ll
        if not np.isfinite(loss_b):      # zero_infinity
            loss_b = 0.0
        losses.append(loss_b / max(L, 1))
    return float(np.mean(losses))


# ----------------------------------------------------------------------------
if __name__ == "__main__":
    B, T, C, L_max = 2, 16, 32, 5

    key = jax.random.PRNGKey(0)
    k1, k2 = jax.random.split(key)
    preds = jax.random.normal(k1, (B, T, C), dtype=jnp.float32)        # (B, T, C)
    text = jax.random.randint(k2, (B, L_max), 1, C, dtype=jnp.int32)   # labels in [1, C)
    length = jnp.array([4, 3], dtype=jnp.int32)                        # target lengths
    preds_size = jnp.array([16, 14], dtype=jnp.int32)                  # input lengths

    # t_chunk=8 -> two time chunks, exercising the carried-alpha streaming path.
    loss = ctc_loss(preds, text, preds_size, length, t_chunk=8)
    loss = jax.block_until_ready(loss)

    ref = reference_loss(np.asarray(preds), np.asarray(text),
                         np.asarray(preds_size), np.asarray(length))

    assert np.isfinite(float(loss))
    assert abs(float(loss) - ref) < 2e-3, f"pallas={float(loss)} ref={ref}"
    print("KERNEL_OK")
</pallas_src>

<mosaic_0001>
module attributes {stable_mosaic.version = 11 : i64} {
  func.func @kernel(%arg0: i32, %arg1: i32, %arg2: memref<1xi32, #tpu.memory_space<smem>>, %arg3: memref<8x8x32xf32, #tpu.memory_space<vmem>>, %arg4: memref<8x128xi32, #tpu.memory_space<vmem>>, %arg5: memref<8x128xf32, #tpu.memory_space<vmem>>, %arg6: memref<8x128xf32, #tpu.memory_space<vmem>>, %arg7: memref<8x128xf32, #tpu.memory_space<vmem>>, %arg8: memref<8x1xi32, #tpu.memory_space<vmem>>, %arg9: memref<8x128xf32, #tpu.memory_space<vmem>>, %arg10: memref<8x8x128xf32, #tpu.memory_space<vmem>>, %arg11: memref<8x128xf32, #tpu.memory_space<vmem>>) attributes {dimension_semantics = [#tpu.dimension_semantics<parallel>, #tpu.dimension_semantics<arbitrary>], iteration_bounds = array<i64: 1, 2>, scalar_prefetch = 1 : i64, scratch_operands = 2 : i64, tpu.core_type = #tpu.core_type<tc>, window_params = [{transform_indices = @transform_0, window_bounds = array<i64: 8, 8, 32>}, {transform_indices = @transform_1, window_bounds = array<i64: 8, 128>}, {transform_indices = @transform_2, window_bounds = array<i64: 8, 128>}, {transform_indices = @transform_3, window_bounds = array<i64: 8, 128>}, {transform_indices = @transform_4, window_bounds = array<i64: 8, 128>}, {transform_indices = @transform_5, window_bounds = array<i64: 8, 1>}, {transform_indices = @transform_6, window_bounds = array<i64: 8, 128>}]} {
    %c8_i32 = arith.constant 8 : i32
    %0 = arith.muli %arg1, %c8_i32 : i32
    %1 = arith.index_cast %arg0 : i32 to index
    %2 = memref.load %arg2[%1] : memref<1xi32, #tpu.memory_space<smem>>
    %3 = arith.cmpi slt, %0, %2 : i32
    %c0_i32 = arith.constant 0 : i32
    %4 = arith.cmpi eq, %arg1, %c0_i32 : i32
    %5 = arith.ori %3, %4 : i1
    %6 = arith.extui %5 : i1 to i32
    %c0_i32_0 = arith.constant 0 : i32
    %7 = arith.cmpi ne, %6, %c0_i32_0 : i32
    scf.if %7 {
      %c0_18 = arith.constant 0 : index
      %c0_19 = arith.constant 0 : index
      %c0_20 = arith.constant 0 : index
      %31 = vector.load %arg3[%c0_18, %c0_19, %c0_20] : memref<8x8x32xf32, #tpu.memory_space<vmem>>, vector<8x8x32xf32>
      %cst = arith.constant dense<0xFF800000> : vector<8x8xf32>
      %32 = vector.multi_reduction <maximumf>, %31, %cst [2] : vector<8x8x32xf32> to vector<8x8xf32>
      %33 = vector.shape_cast %32 : vector<8x8xf32> to vector<8x8x1xf32>
      %34 = vector.broadcast %33 : vector<8x8x1xf32> to vector<8x8x32xf32>
      %35 = arith.subf %31, %34 : vector<8x8x32xf32>
      %36 = math.exp %35 : vector<8x8x32xf32>
      %cst_21 = arith.constant dense<0.000000e+00> : vector<8x8xf32>
      %37 = vector.multi_reduction <add>, %36, %cst_21 [2] : vector<8x8x32xf32> to vector<8x8xf32>
      %38 = vector.shape_cast %37 : vector<8x8xf32> to vector<8x8x1xf32>
      %39 = math.log %38 : vector<8x8x1xf32>
      %40 = vector.broadcast %39 : vector<8x8x1xf32> to vector<8x8x32xf32>
      %41 = arith.subf %35, %40 : vector<8x8x32xf32>
      %42 = tpu.iota {dimensions = array<i32: 1>} : vector<8x32x128xi32>
      %c0_22 = arith.constant 0 : index
      %c0_23 = arith.constant 0 : index
      %43 = vector.load %arg4[%c0_22, %c0_23] : memref<8x128xi32, #tpu.memory_space<vmem>>, vector<8x128xi32>
      %44 = vector.shape_cast %43 : vector<8x128xi32> to vector<8x1x128xi32>
      %45 = vector.broadcast %44 : vector<8x1x128xi32> to vector<8x32x128xi32>
      %46 = arith.cmpi eq, %42, %45 : vector<8x32x128xi32>
      %47 = arith.extui %46 : vector<8x32x128xi1> to vector<8x32x128xi32>
      %48 = arith.sitofp %47 : vector<8x32x128xi32> to vector<8x32x128xf32>
      "tpu.trace_start"() <{level = 10 : i32, message = "gtc,gcs->gts"}> : () -> ()
      %cst_24 = arith.constant dense<0.000000e+00> : vector<8x8x128xf32>
      %49 = tpu.matmul %41, %48, %cst_24 {dimension_numbers = #tpu.dot_dimension_numbers<[2], [1], [1], [2], [0, 0, 0, 1, 1, 2], [0], [0]>} : vector<8x8x32xf32>, vector<8x32x128xf32>, vector<8x8x128xf32> -> vector<8x8x128xf32>
      "tpu.trace_stop"() : () -> ()
      %50 = tpu.transpose %49, [1, 0, 2] : vector<8x8x128xf32> -> vector<8x8x128xf32>
      %c0_25 = arith.constant 0 : index
      %c0_26 = arith.constant 0 : index
      %c0_27 = arith.constant 0 : index
      %51 = vector.load %arg10[%c0_25, %c0_26, %c0_27] : memref<8x8x128xf32, #tpu.memory_space<vmem>>, vector<8x8x128xf32>
      tpu.vector_store %arg10[%c0_25, %c0_26, %c0_27], %50 {strides = array<i32>} : memref<8x8x128xf32, #tpu.memory_space<vmem>>, vector<8x8x128xf32>,
    } else {
    }
    %c0 = arith.constant 0 : index
    %c0_1 = arith.constant 0 : index
    %8 = vector.load %arg6[%c0, %c0_1] : memref<8x128xf32, #tpu.memory_space<vmem>>, vector<8x128xf32>
    %c0_2 = arith.constant 0 : index
    %c0_3 = arith.constant 0 : index
    %9 = vector.load %arg8[%c0_2, %c0_3] : memref<8x1xi32, #tpu.memory_space<vmem>>, vector<8x1xi32>
    %10 = tpu.iota {dimensions = array<i32: 1>} : vector<8x128xi32>
    %c1_i32 = arith.constant 1 : i32
    %11 = vector.broadcast %c1_i32 : i32 to vector<8x128xi32>
    %12 = arith.cmpi slt, %10, %11 : vector<8x128xi32>
    %c2_i32 = arith.constant 2 : i32
    %13 = vector.broadcast %c2_i32 : i32 to vector<8x128xi32>
    %14 = arith.cmpi slt, %10, %13 : vector<8x128xi32>
    %c0_i32_4 = arith.constant 0 : i32
    %15 = arith.cmpi eq, %arg1, %c0_i32_4 : i32
    %16 = arith.extui %15 : i1 to i32
    %c0_i32_5 = arith.constant 0 : i32
    %17 = arith.cmpi ne, %16, %c0_i32_5 : i32
    scf.if %17 {
      %c0_18 = arith.constant 0 : index
      %c0_19 = arith.constant 0 : index
      %c0_20 = arith.constant 0 : index
      %31 = vector.load %arg10[%c0_18, %c0_19, %c0_20] : memref<8x8x128xf32, #tpu.memory_space<vmem>>, vector<1x8x128xf32>
      %32 = vector.shape_cast %31 : vector<1x8x128xf32> to vector<8x128xf32>
      %c0_21 = arith.constant 0 : index
      %c0_22 = arith.constant 0 : index
      %33 = vector.load %arg5[%c0_21, %c0_22] : memref<8x128xf32, #tpu.memory_space<vmem>>, vector<8x128xf32>
      %34 = arith.addf %32, %33 : vector<8x128xf32>
      %c0_23 = arith.constant 0 : index
      %c0_24 = arith.constant 0 : index
      %35 = vector.load %arg11[%c0_23, %c0_24] : memref<8x128xf32, #tpu.memory_space<vmem>>, vector<8x128xf32>
      tpu.vector_store %arg11[%c0_23, %c0_24], %34 {strides = array<i32>} : memref<8x128xf32, #tpu.memory_space<vmem>>, vector<8x128xf32>,
    } else {
    }
    %c0_i32_6 = arith.constant 0 : i32
    %18 = arith.cmpi eq, %arg1, %c0_i32_6 : i32
    %c1_i32_7 = arith.constant 1 : i32
    %c0_i32_8 = arith.constant 0 : i32
    %19 = arith.select %18, %c1_i32_7, %c0_i32_8 : i32
    %20 = arith.subi %2, %0 : i32
    %c0_i32_9 = arith.constant 0 : i32
    %c8_i32_10 = arith.constant 8 : i32
    %21 = arith.maxsi %c0_i32_9, %20 : i32
    %22 = arith.minsi %c8_i32_10, %21 : i32
    %c0_11 = arith.constant 0 : index
    %c0_12 = arith.constant 0 : index
    %23 = vector.load %arg11[%c0_11, %c0_12] : memref<8x128xf32, #tpu.memory_space<vmem>>, vector<8x128xf32>
    %24 = arith.subi %22, %19 : i32
    %25 = arith.addi %19, %24 : i32
    %c1_i32_13 = arith.constant 1 : i32
    %26 = scf.for %arg12 = %19 to %25 step %c1_i32_13 iter_args(%arg13 = %23) -> (vector<8x128xf32>)  : i32 {
      %c1_i32_18 = arith.constant 1 : i32
      %31 = tpu.dynamic_rotate %arg13 by %c1_i32_18 dim 1 : vector<8x128xf32>, i32 -> vector<8x128xf32>
      %cst = arith.constant -1.000000e+30 : f32
      %32 = vector.broadcast %cst : f32 to vector<8x128xf32>
      %33 = arith.select %12, %32, %31 : vector<8x128xi1>, vector<8x128xf32>
      %c2_i32_19 = arith.constant 2 : i32
      %34 = tpu.dynamic_rotate %arg13 by %c2_i32_19 dim 1 : vector<8x128xf32>, i32 -> vector<8x128xf32>
      %cst_20 = arith.constant -1.000000e+30 : f32
      %35 = vector.broadcast %cst_20 : f32 to vector<8x128xf32>
      %36 = arith.select %14, %35, %34 : vector<8x128xi1>, vector<8x128xf32>
      %37 = arith.addf %36, %8 : vector<8x128xf32>
      %38 = arith.maximumf %arg13, %33 : vector<8x128xf32>
      %39 = arith.maximumf %38, %37 : vector<8x128xf32>
      %40 = arith.subf %arg13, %39 : vector<8x128xf32>
      %41 = math.exp %40 : vector<8x128xf32>
      %42 = arith.subf %33, %39 : vector<8x128xf32>
      %43 = math.exp %42 : vector<8x128xf32>
      %44 = arith.addf %41, %43 : vector<8x128xf32>
      %45 = arith.subf %37, %39 : vector<8x128xf32>
      %46 = math.exp %45 : vector<8x128xf32>
      %47 = arith.addf %44, %46 : vector<8x128xf32>
      %48 = math.log %47 : vector<8x128xf32>
      %49 = arith.addf %39, %48 : vector<8x128xf32>
      %50 = arith.index_cast %arg12 : i32 to index
      %c0_21 = arith.constant 0 : index
      %c0_22 = arith.constant 0 : index
      %51 = vector.load %arg10[%50, %c0_21, %c0_22] : memref<8x8x128xf32, #tpu.memory_space<vmem>>, vector<1x8x128xf32>
      %52 = vector.shape_cast %51 : vector<1x8x128xf32> to vector<8x128xf32>
      %53 = arith.addf %52, %49 : vector<8x128xf32>
      %54 = arith.addi %0, %arg12 : i32
      %55 = vector.broadcast %54 : i32 to vector<8x1xi32>
      %56 = arith.cmpi slt, %55, %9 : vector<8x1xi32>
      %57 = vector.shape_cast %56 : vector<8x1xi1> to vector<8x1xi1>
      %58 = vector.broadcast %57 : vector<8x1xi1> to vector<8x128xi1>
      %59 = arith.select %58, %53, %arg13 : vector<8x128xi1>, vector<8x128xf32>
      scf.yield %59 : vector<8x128xf32>
    }
    %c0_14 = arith.constant 0 : index
    %c0_15 = arith.constant 0 : index
    %27 = vector.load %arg11[%c0_14, %c0_15] : memref<8x128xf32, #tpu.memory_space<vmem>>, vector<8x128xf32>
    tpu.vector_store %arg11[%c0_14, %c0_15], %26 {strides = array<i32>} : memref<8x128xf32, #tpu.memory_space<vmem>>, vector<8x128xf32>,
    %c1_i32_16 = arith.constant 1 : i32
    %28 = arith.cmpi eq, %arg1, %c1_i32_16 : i32
    %29 = arith.extui %28 : i1 to i32
    %c0_i32_17 = arith.constant 0 : i32
    %30 = arith.cmpi ne, %29, %c0_i32_17 : i32
    scf.if %30 {
      %c0_18 = arith.constant 0 : index
      %c0_19 = arith.constant 0 : index
      %31 = vector.load %arg11[%c0_18, %c0_19] : memref<8x128xf32, #tpu.memory_space<vmem>>, vector<8x128xf32>
      %c0_20 = arith.constant 0 : index
      %c0_21 = arith.constant 0 : index
      %32 = vector.load %arg7[%c0_20, %c0_21] : memref<8x128xf32, #tpu.memory_space<vmem>>, vector<8x128xf32>
      %33 = arith.addf %31, %32 : vector<8x128xf32>
      %cst = arith.constant dense<0xFF800000> : vector<8xf32>
      %34 = vector.multi_reduction <maximumf>, %33, %cst [1] : vector<8x128xf32> to vector<8xf32>
      %35 = vector.shape_cast %34 : vector<8xf32> to vector<8x1xf32>
      %36 = vector.broadcast %35 : vector<8x1xf32> to vector<8x128xf32>
      %37 = arith.subf %33, %36 : vector<8x128xf32>
      %38 = math.exp %37 : vector<8x128xf32>
      %cst_22 = arith.constant dense<0.000000e+00> : vector<8xf32>
      %39 = vector.multi_reduction <add>, %38, %cst_22 [1] : vector<8x128xf32> to vector<8xf32>
      %40 = vector.shape_cast %39 : vector<8xf32> to vector<8x1xf32>
      %41 = math.log %40 : vector<8x1xf32>
      %42 = arith.addf %35, %41 : vector<8x1xf32>
      %cst_23 = arith.constant 0.000000e+00 : f32
      %43 = vector.broadcast %cst_23 : f32 to vector<8x1xf32>
      %44 = arith.subf %43, %42 : vector<8x1xf32>
      %45 = vector.shape_cast %44 : vector<8x1xf32> to vector<8x1xf32>
      %46 = vector.broadcast %45 : vector<8x1xf32> to vector<8x128xf32>
      %c0_24 = arith.constant 0 : index
      %c0_25 = arith.constant 0 : index
      %47 = vector.load %arg9[%c0_24, %c0_25] : memref<8x128xf32, #tpu.memory_space<vmem>>, vector<8x128xf32>
      tpu.vector_store %arg9[%c0_24, %c0_25], %46 {strides = array<i32>} : memref<8x128xf32, #tpu.memory_space<vmem>>, vector<8x128xf32>,
    } else {
    }
    return
  }
  func.func @transform_0(%arg0: i32, %arg1: i32, %arg2: memref<1xi32, #tpu.memory_space<smem>>) -> (i32, i32, i32) {
    %c0_i32 = arith.constant 0 : i32
    %c0_i32_0 = arith.constant 0 : i32
    return %arg0, %arg1, %c0_i32 : i32, i32, i32
  }
  func.func @transform_1(%arg0: i32, %arg1: i32, %arg2: memref<1xi32, #tpu.memory_space<smem>>) -> (i32, i32) {
    %c0_i32 = arith.constant 0 : i32
    %c0_i32_0 = arith.constant 0 : i32
    return %arg0, %c0_i32 : i32, i32
  }
  func.func @transform_2(%arg0: i32, %arg1: i32, %arg2: memref<1xi32, #tpu.memory_space<smem>>) -> (i32, i32) {
    %c0_i32 = arith.constant 0 : i32
    %c0_i32_0 = arith.constant 0 : i32
    return %arg0, %c0_i32 : i32, i32
  }
  func.func @transform_3(%arg0: i32, %arg1: i32, %arg2: memref<1xi32, #tpu.memory_space<smem>>) -> (i32, i32) {
    %c0_i32 = arith.constant 0 : i32
    %c0_i32_0 = arith.constant 0 : i32
    return %arg0, %c0_i32 : i32, i32
  }
  func.func @transform_4(%arg0: i32, %arg1: i32, %arg2: memref<1xi32, #tpu.memory_space<smem>>) -> (i32, i32) {
    %c0_i32 = arith.constant 0 : i32
    %c0_i32_0 = arith.constant 0 : i32
    return %arg0, %c0_i32 : i32, i32
  }
  func.func @transform_5(%arg0: i32, %arg1: i32, %arg2: memref<1xi32, #tpu.memory_space<smem>>) -> (i32, i32) {
    %c0_i32 = arith.constant 0 : i32
    %c0_i32_0 = arith.constant 0 : i32
    return %arg0, %c0_i32 : i32, i32
  }
  func.func @transform_6(%arg0: i32, %arg1: i32, %arg2: memref<1xi32, #tpu.memory_space<smem>>) -> (i32, i32) {
    %c0_i32 = arith.constant 0 : i32
    %c0_i32_0 = arith.constant 0 : i32
    return %arg0, %c0_i32 : i32, i32
  }
}

</mosaic_0001>

<llo_original>
// kernel: tpu_custom_call.1
$region0: #{tpu_custom_call.1}
  #allocation0 [shape = 'u32[]', space=smem, size = 0x4, offset = 0x4, fixed_abs, tag = 'smem constant byte address 0x4 - core index']
  #allocation1 [shape = 'u32[72,128]{1,0:T(1,128)}', space=vmem, size = 0x9000, scoped, tag = 'internal scratch']
  #allocation2 [shape = 'f32[8,8,128]{2,1,0:T(8,128)}', space=vmem, size = 0x8000, scoped, tag = 'scratch operand']
  #allocation3 [shape = 'f32[8,128]{1,0:T(8,128)}', space=vmem, size = 0x1000, scoped, tag = 'scratch operand']
  #allocation4 [shape = 's32[1]{0}', space=sflag, size = 0x4, scoped, tag = 'scoped memory for tpu_custom_call.1']
  #allocation5 [shape = 's32[1]{0:T(128)S(6)}', space=smem, size = 0x200, scoped, tag = 'prefetched SMEM operand 0']
  %s0 = inlined_call_operand.<no memory space> [shape: s32[1], index: 0, kind: input, shape index: {}]
  %s1 = inlined_call_operand.hbm [shape: f32[8,16,32], index: 1, kind: input, shape index: {}]
  %s2 = inlined_call_operand.vmem [shape: s32[8,128], index: 2, kind: input, shape index: {}]
  %s3 = inlined_call_operand.hbm [shape: f32[8,128], index: 3, kind: input, shape index: {}]
  %s4 = inlined_call_operand.hbm [shape: f32[8,128], index: 4, kind: input, shape index: {}]
  %s5 = inlined_call_operand.hbm [shape: f32[8,128], index: 5, kind: input, shape index: {}]
  %s6 = inlined_call_operand.vmem [shape: s32[8,1], index: 6, kind: input, shape index: {}]
  %s7 = inlined_call_operand.hbm [shape: f32[8,128], index: 7, kind: output, shape index: {}]
  %s8 = sld [smem:[#allocation0]]
  $region92: #{tpu_custom_call.1} parent=0
    _
  %s10 = ssub.s32 1, %s8
  %s11 = scalar_select 0, %s10, %s8
  %12 = sst [smem:[#allocation5]] %s0
  $region1: #{tpu_custom_call.1} parent=0
    #allocation6 [shape = 'u8[65536]{0}', space=vmem, size = 0x10000, scoped, tag = 'input window, operand 1']
    #allocation7 [shape = 's32[2]{0}', space=sflag, size = 0x8, scoped, tag = 'scoped memory for tpu_custom_call.1']
    #allocation8 [shape = 's32[2]{0}', space=sflag, size = 0x8, scoped, tag = 'scoped memory for tpu_custom_call.1']
    #allocation9 [shape = 'u8[4096]{0}', space=vmem, size = 0x1000, scoped, tag = 'input window, operand 3, single buffered']
    #allocation10 [shape = 's32[1]{0}', space=sflag, size = 0x4, scoped, tag = 'scoped memory for tpu_custom_call.1']
    #allocation11 [shape = 'u8[4096]{0}', space=vmem, size = 0x1000, scoped, tag = 'input window, operand 4, single buffered']
    #allocation12 [shape = 'u8[4096]{0}', space=vmem, size = 0x1000, scoped, tag = 'input window, operand 5, single buffered']
    #allocation13 [shape = 's32[1]{0}', space=sflag, size = 0x4, scoped, tag = 'scoped memory for tpu_custom_call.1']
    #allocation14 [shape = 'u8[4096]{0}', space=vmem, size = 0x1000, scoped, tag = 'output window, operand 0, single buffered']
    %13 = vsyncpa [#allocation7], 0
    %s14 = scalar_lea.sflag [#allocation7], 1
    %15 = vsyncpa %s14, 0
    %16 = vsyncpa [#allocation10], 0
    %17 = vsyncpa [#allocation13], 0
    %18 = vsyncpa [#allocation8], 0
    loop: start=0, step=1, limit=4
    $region2: #{tpu_custom_call.1} parent=1 // loop_pre_header
      _
    $region3: #{tpu_custom_call.1} parent=1 // loop_header
      %s20 = sphi 0, %s24
      %p21 = scmp.ge.s32.totalorder %s20, 4
      %s27 = sphi 0, %s39
      %s28 = sphi 0, %s35
      %s29 = sphi 0, %s27
      %s30 = sphi 0, %s28
      %s31 = sphi 0, %s29
      %s32 = sphi 0, %s30
      %s44 = sphi 0, %s46
      %s47 = sphi 0, %s44
      %s48 = sphi 0, %s47
      %s64 = sphi 0, %s48
      %s70 = sphi 0, %s72
      %s73 = sphi 0, %s70
      %s74 = sphi 0, %s73
      %s90 = sphi 0, %s74
      %s96 = sphi 0, %s98
      %s99 = sphi 0, %s96
      %s100 = sphi 0, %s99
      %s116 = sphi 0, %s100
      %s122 = sphi 0, %s124
      %s125 = sphi 0, %s122
      %s126 = sphi 0, %s125
      %s142 = sphi 0, %s126
      %s148 = sphi 0, %s150
      %s151 = sphi 0, %s148
      %s152 = sphi 0, %s151
      %s168 = sphi 0, %s152
      %s174 = sphi 0, %s176
      %s177 = sphi 0, %s174
      %s178 = sphi 0, %s177
      %s194 = sphi 0, %s178
      %s200 = sphi 0, %s202
      %s203 = sphi 0, %s200
      %s204 = sphi 0, %s203
      %s220 = sphi 0, %s204
    $region4: #{tpu_custom_call.1} parent=1 // loop_header_branch
      %23 = sbr.rel (%p21) target = $region8
    $region5: #{tpu_custom_call.1} parent=1 // loop_body
      %s25 = ssub.s32 %s20, 1
      %s26 = ssub.s32 %s20, 2
      %s33 = sadd.s32 1, %s28
      %p34 = scmp.ge.s32.totalorder %s33, 2
      %s35 = scalar_select %p34, 0, %s33
      %s36 = sadd.s32 1, %s27
      %s37 = scalar_select %p34, %s36, %s27
      %p38 = scmp.ge.s32.totalorder %s37, 1
      %s39 = scalar_select %p38, 0, %s37
      %s40 = ssub.s32 %s27, %s39
      %s41 = ssub.s32 %s28, %s35
      %s42 = sor.u32 %s40, %s41
      %p43 = scmp.eq.s32.totalorder %s42, 0
      %s45 = sadd.s32 %s44, 1
      %s46 = scalar_select %p43, %s44, %s45
      %p49 = pneg %p43
      %p50 = scmp.eq.s32.totalorder %s20, 1
      %p51 = por %p49, %p50
      %p52 = scmp.ne.s32.totalorder %s44, %s47
      %p53 = scmp.eq.s32.totalorder %s20, 0
      %p54 = por %p52, %p53
      %p55 = scmp.ne.s32.totalorder %s44, %s47
      %p56 = scmp.eq.s32.totalorder %s25, 1
      %p57 = por %p55, %p56
      %p58 = scmp.ne.s32.totalorder %s47, %s48
      %p59 = scmp.eq.s32.totalorder %s25, 0
      %p60 = por %p58, %p59
      %p61 = scmp.ne.s32.totalorder %s47, %s48
      %p62 = scmp.eq.s32.totalorder %s26, 1
      %p63 = por %p61, %p62
      %p65 = scmp.ne.s32.totalorder %s48, %s64
      %p66 = scmp.eq.s32.totalorder %s26, 0
      %p67 = por %p65, %p66
      %s68 = ssub.s32 %s27, %s39
      %p69 = scmp.eq.s32.totalorder %s68, 0
      %s71 = sadd.s32 %s70, 1
      %s72 = scalar_select %p69, %s70, %s71
      %p75 = pneg %p69
      %p76 = scmp.eq.s32.totalorder %s20, 1
      %p77 = por %p75, %p76
      %p78 = scmp.ne.s32.totalorder %s70, %s73
      %p79 = scmp.eq.s32.totalorder %s20, 0
      %p80 = por %p78, %p79
      %p81 = scmp.ne.s32.totalorder %s70, %s73
      %p82 = scmp.eq.s32.totalorder %s25, 1
      %p83 = por %p81, %p82
      %p84 = scmp.ne.s32.totalorder %s73, %s74
      %p85 = scmp.eq.s32.totalorder %s25, 0
      %p86 = por %p84, %p85
      %p87 = scmp.ne.s32.totalorder %s73, %s74
      %p88 = scmp.eq.s32.totalorder %s26, 1
      %p89 = por %p87, %p88
      %p91 = scmp.ne.s32.totalorder %s74, %s90
      %p92 = scmp.eq.s32.totalorder %s26, 0
      %p93 = por %p91, %p92
      %s94 = ssub.s32 %s27, %s39
      %p95 = scmp.eq.s32.totalorder %s94, 0
      %s97 = sadd.s32 %s96, 1
      %s98 = scalar_select %p95, %s96, %s97
      %p101 = pneg %p95
      %p102 = scmp.eq.s32.totalorder %s20, 1
      %p103 = por %p101, %p102
      %p104 = scmp.ne.s32.totalorder %s96, %s99
      %p105 = scmp.eq.s32.totalorder %s20, 0
      %p106 = por %p104, %p105
      %p107 = scmp.ne.s32.totalorder %s96, %s99
      %p108 = scmp.eq.s32.totalorder %s25, 1
      %p109 = por %p107, %p108
      %p110 = scmp.ne.s32.totalorder %s99, %s100
      %p111 = scmp.eq.s32.totalorder %s25, 0
      %p112 = por %p110, %p111
      %p113 = scmp.ne.s32.totalorder %s99, %s100
      %p114 = scmp.eq.s32.totalorder %s26, 1
      %p115 = por %p113, %p114
      %p117 = scmp.ne.s32.totalorder %s100, %s116
      %p118 = scmp.eq.s32.totalorder %s26, 0
      %p119 = por %p117, %p118
      %s120 = ssub.s32 %s27, %s39
      %p121 = scmp.eq.s32.totalorder %s120, 0
      %s123 = sadd.s32 %s122, 1
      %s124 = scalar_select %p121, %s122, %s123
      %p127 = pneg %p121
      %p128 = scmp.eq.s32.totalorder %s20, 1
      %p129 = por %p127, %p128
      %p130 = scmp.ne.s32.totalorder %s122, %s125
      %p131 = scmp.eq.s32.totalorder %s20, 0
      %p132 = por %p130, %p131
      %p133 = scmp.ne.s32.totalorder %s122, %s125
      %p134 = scmp.eq.s32.totalorder %s25, 1
      %p135 = por %p133, %p134
      %p136 = scmp.ne.s32.totalorder %s125, %s126
      %p137 = scmp.eq.s32.totalorder %s25, 0
      %p138 = por %p136, %p137
      %p139 = scmp.ne.s32.totalorder %s125, %s126
      %p140 = scmp.eq.s32.totalorder %s26, 1
      %p141 = por %p139, %p140
      %p143 = scmp.ne.s32.totalorder %s126, %s142
      %p144 = scmp.eq.s32.totalorder %s26, 0
      %p145 = por %p143, %p144
      %s146 = ssub.s32 %s27, %s39
      %p147 = scmp.eq.s32.totalorder %s146, 0
      %s149 = sadd.s32 %s148, 1
      %s150 = scalar_select %p147, %s148, %s149
      %p153 = pneg %p147
      %p154 = scmp.eq.s32.totalorder %s20, 1
      %p155 = por %p153, %p154
      %p156 = scmp.ne.s32.totalorder %s148, %s151
      %p157 = scmp.eq.s32.totalorder %s20, 0
      %p158 = por %p156, %p157
      %p159 = scmp.ne.s32.totalorder %s148, %s151
      %p160 = scmp.eq.s32.totalorder %s25, 1
      %p161 = por %p159, %p160
      %p162 = scmp.ne.s32.totalorder %s151, %s152
      %p163 = scmp.eq.s32.totalorder %s25, 0
      %p164 = por %p162, %p163
      %p165 = scmp.ne.s32.totalorder %s151, %s152
      %p166 = scmp.eq.s32.totalorder %s26, 1
      %p167 = por %p165, %p166
      %p169 = scmp.ne.s32.totalorder %s152, %s168
      %p170 = scmp.eq.s32.totalorder %s26, 0
      %p171 = por %p169, %p170
      %s172 = ssub.s32 %s27, %s39
      %p173 = scmp.eq.s32.totalorder %s172, 0
      %s175 = sadd.s32 %s174, 1
      %s176 = scalar_select %p173, %s174, %s175
      %p179 = pneg %p173
      %p180 = scmp.eq.s32.totalorder %s20, 1
      %p181 = por %p179, %p180
      %p182 = scmp.ne.s32.totalorder %s174, %s177
      %p183 = scmp.eq.s32.totalorder %s20, 0
      %p184 = por %p182, %p183
      %p185 = scmp.ne.s32.totalorder %s174, %s177
      %p186 = scmp.eq.s32.totalorder %s25, 1
      %p187 = por %p185, %p186
      %p188 = scmp.ne.s32.totalorder %s177, %s178
      %p189 = scmp.eq.s32.totalorder %s25, 0
      %p190 = por %p188, %p189
      %p191 = scmp.ne.s32.totalorder %s177, %s178
      %p192 = scmp.eq.s32.totalorder %s26, 1
      %p193 = por %p191, %p192
      %p195 = scmp.ne.s32.totalorder %s178, %s194
      %p196 = scmp.eq.s32.totalorder %s26, 0
      %p197 = por %p195, %p196
      %s198 = ssub.s32 %s27, %s39
      %p199 = scmp.eq.s32.totalorder %s198, 0
      %s201 = sadd.s32 %s200, 1
      %s202 = scalar_select %p199, %s200, %s201
      %p205 = pneg %p199
      %p206 = scmp.eq.s32.totalorder %s20, 1
      %p207 = por %p205, %p206
      %p208 = scmp.ne.s32.totalorder %s200, %s203
      %p209 = scmp.eq.s32.totalorder %s20, 0
      %p210 = por %p208, %p209
      %p211 = scmp.ne.s32.totalorder %s200, %s203
      %p212 = scmp.eq.s32.totalorder %s25, 1
      %p213 = por %p211, %p212
      %p214 = scmp.ne.s32.totalorder %s203, %s204
      %p215 = scmp.eq.s32.totalorder %s25, 0
      %p216 = por %p214, %p215
      %p217 = scmp.ne.s32.totalorder %s203, %s204
      %p218 = scmp.eq.s32.totalorder %s26, 1
      %p219 = por %p217, %p218
      %p221 = scmp.ne.s32.totalorder %s204, %s220
      %p222 = scmp.eq.s32.totalorder %s26, 0
      %p223 = por %p221, %p222
      %p224 = scmp.le.s32.totalorder 1, %s20
      %p225 = scmp.lt.s32.totalorder %s20, 3
      %p226 = pnand %p224, %p225
      %p227 = pneg %p226
      // Predicated region
      $region9: #{tpu_custom_call.1} parent=5 // pred_check
        _
      $region10: #{tpu_custom_call.1} parent=5 // pred_check_branch
        %229 = sbr.rel (%p226) target = $region12
      $region11: #{tpu_custom_call.1} parent=5 // pred_region
        %s230 = ssub.s32 %s20, 1
        // Predicated region
        $region13: #{tpu_custom_call.1} parent=11 // pred_check
          %p231 = pneg %p86
        $region14: #{tpu_custom_call.1} parent=11 // pred_check_branch
          %233 = sbr.rel (%p231) target = $region16
        $region15: #{tpu_custom_call.1} parent=11 // pred_region
          %p234 = scmp.lt.s32.totalorder %s29, 0
          %s235 = scalar_select %p234, %s29, 0
          %s236 = smul.addr %s235, 8
          %s237 = scalar_lea.vmem %s2, %s236
        $region16: #{tpu_custom_call.1} parent=11 // pred_fallthru
          _
        // Predicated region
        $region17: #{tpu_custom_call.1} parent=11 // pred_check
          %p238 = pneg %p112
        $region18: #{tpu_custom_call.1} parent=11 // pred_check_branch
          %240 = sbr.rel (%p238) target = $region20
        $region19: #{tpu_custom_call.1} parent=11 // pred_region
          %242 = vsyncadd [#allocation10], 0
          %s243 = smul.addr %s29, 8
          %s244 = scalar_lea.hbm %s3, %s243
          %s246 = sshll.u32 %s244, 4
          %s247 = int_to_ptr.hbm [resolvable:$true] %s246
          %s248 = sshll.u32 [#allocation9], 4
          %s249 = int_to_ptr.vmem [resolvable:$true] %s248
          %251 = dma.hbm_to_vmem [thread:$0]  %s247, 128, %s249, [#allocation10]
        $region20: #{tpu_custom_call.1} parent=11 // pred_fallthru
          _
        // Predicated region
        $region21: #{tpu_custom_call.1} parent=11 // pred_check
          %p252 = pneg %p138
        $region22: #{tpu_custom_call.1} parent=11 // pred_check_branch
          %254 = sbr.rel (%p252) target = $region24
        $region23: #{tpu_custom_call.1} parent=11 // pred_region
          %256 = vsyncadd [#allocation10], 0
          %s257 = smul.addr %s29, 8
          %s258 = scalar_lea.hbm %s4, %s257
          %s260 = sshll.u32 %s258, 4
          %s261 = int_to_ptr.hbm [resolvable:$true] %s260
          %s262 = sshll.u32 [#allocation11], 4
          %s263 = int_to_ptr.vmem [resolvable:$true] %s262
          %265 = dma.hbm_to_vmem [thread:$0]  %s261, 128, %s263, [#allocation10]
        $region24: #{tpu_custom_call.1} parent=11 // pred_fallthru
          _
        // Predicated region
        $region25: #{tpu_custom_call.1} parent=11 // pred_check
          %p266 = pneg %p164
        $region26: #{tpu_custom_call.1} parent=11 // pred_check_branch
          %268 = sbr.rel (%p266) target = $region28
        $region27: #{tpu_custom_call.1} parent=11 // pred_region
          %270 = vsyncadd [#allocation13], 0
          %s271 = smul.addr %s29, 8
          %s272 = scalar_lea.hbm %s5, %s271
          %s274 = sshll.u32 %s272, 4
          %s275 = int_to_ptr.hbm [resolvable:$true] %s274
          %s276 = sshll.u32 [#allocation12], 4
          %s277 = int_to_ptr.vmem [resolvable:$true] %s276
          %279 = dma.hbm_to_vmem [thread:$0]  %s275, 128, %s277, [#allocation13]
        $region28: #{tpu_custom_call.1} parent=11 // pred_fallthru
          _
        // Predicated region
        $region29: #{tpu_custom_call.1} parent=11 // pred_check
          %p280 = pneg %p190
        $region30: #{tpu_custom_call.1} parent=11 // pred_check_branch
          %282 = sbr.rel (%p280) target = $region32
        $region31: #{tpu_custom_call.1} parent=11 // pred_region
          %p283 = scmp.lt.s32.totalorder %s29, 0
          %s284 = scalar_select %p283, %s29, 0
          %s285 = smul.addr %s284, 8
          %s286 = scalar_lea.vmem %s6, %s285
        $region32: #{tpu_custom_call.1} parent=11 // pred_fallthru
          _
      $region12: #{tpu_custom_call.1} parent=5 // pred_fallthru
        _
      %p287 = scmp.lt.s32.totalorder %s20, 2
      // Predicated region
      $region33: #{tpu_custom_call.1} parent=5 // pred_check
        %p288 = pneg %p287
      $region34: #{tpu_custom_call.1} parent=5 // pred_check_branch
        %290 = sbr.rel (%p288) target = $region36
      $region35: #{tpu_custom_call.1} parent=5 // pred_region
        // Predicated region
        $region37: #{tpu_custom_call.1} parent=35 // pred_check
          %p291 = pneg %p54
        $region38: #{tpu_custom_call.1} parent=35 // pred_check_branch
          %293 = sbr.rel (%p291) target = $region40
        $region39: #{tpu_custom_call.1} parent=35 // pred_region
          %s294 = sand.u32 %s44, 1
          %s295 = scalar_lea.sflag [#allocation7], %s294
          %s296 = sand.u32 %s44, 1
          %s297 = smul.addr %s296, 64
          %s298 = scalar_lea.vmem [#allocation6], %s297
          %s299 = smul.u32 8, %s27
          %301 = vsyncadd %s295, 0
          %s302 = smul.addr %s299, 2
          %s303 = sadd.s32 %s28, %s302
          %s304 = smul.addr %s303, 8
          %s305 = scalar_lea.hbm %s1, %s304
          %s306 = sshll.u32 %s305, 4
          %s307 = int_to_ptr.hbm [resolvable:$true] %s306
          %s308 = sshll.u32 %s298, 4
          %s309 = int_to_ptr.vmem [resolvable:$true] %s308
          %314 = dma.hbm_to_vmem [thread:$0]  %s307, 1024, %s309, %s295, 256, 128, 8
        $region40: #{tpu_custom_call.1} parent=35 // pred_fallthru
          _
      $region36: #{tpu_custom_call.1} parent=5 // pred_fallthru
        _
      %p315 = scmp.le.s32.totalorder 1, %s20
      %p316 = scmp.lt.s32.totalorder %s20, 3
      %p317 = pnand %p315, %p316
      %p318 = pneg %p317
      // Predicated region
      $region41: #{tpu_custom_call.1} parent=5 // pred_check
        _
      $region42: #{tpu_custom_call.1} parent=5 // pred_check_branch
        %320 = sbr.rel (%p317) target = $region44
      $region43: #{tpu_custom_call.1} parent=5 // pred_region
        %s321 = ssub.s32 %s20, 1
        %s322 = sand.u32 %s47, 1
        %s323 = scalar_lea.sflag [#allocation7], %s322
        %s324 = sand.u32 %s47, 1
        %s325 = smul.addr %s324, 64
        %s326 = scalar_lea.vmem [#allocation6], %s325
        // Predicated region
        $region45: #{tpu_custom_call.1} parent=43 // pred_check
          %p327 = pneg %p60
        $region46: #{tpu_custom_call.1} parent=43 // pred_check_branch
          %329 = sbr.rel (%p327) target = $region48
        $region47: #{tpu_custom_call.1} parent=43 // pred_region
          %331 = dma.done %s323, 1024
        $region48: #{tpu_custom_call.1} parent=43 // pred_fallthru
          _
        // Predicated region
        $region49: #{tpu_custom_call.1} parent=43 // pred_check
          %p332 = pneg %p112
        $region50: #{tpu_custom_call.1} parent=43 // pred_check_branch
          %334 = sbr.rel (%p332) target = $region52
        $region51: #{tpu_custom_call.1} parent=43 // pred_region
          %336 = dma.done [#allocation10], 128
        $region52: #{tpu_custom_call.1} parent=43 // pred_fallthru
          _
        // Predicated region
        $region53: #{tpu_custom_call.1} parent=43 // pred_check
          %p337 = pneg %p138
        $region54: #{tpu_custom_call.1} parent=43 // pred_check_branch
          %339 = sbr.rel (%p337) target = $region56
        $region55: #{tpu_custom_call.1} parent=43 // pred_region
          %341 = dma.done [#allocation10], 128
        $region56: #{tpu_custom_call.1} parent=43 // pred_fallthru
          _
        // Predicated region
        $region57: #{tpu_custom_call.1} parent=43 // pred_check
          %p342 = pneg %p164
        $region58: #{tpu_custom_call.1} parent=43 // pred_check_branch
          %344 = sbr.rel (%p342) target = $region60
        $region59: #{tpu_custom_call.1} parent=43 // pred_region
          %346 = dma.done [#allocation13], 128
        $region60: #{tpu_custom_call.1} parent=43 // pred_fallthru
          _
        %s347 = sand.u32 %s47, 1
        %s348 = scalar_lea.sflag [#allocation7], %s347
        %s349 = sand.u32 %s47, 1
        %s350 = smul.addr %s349, 64
        %s351 = scalar_lea.vmem [#allocation6], %s350
        %p352 = pneg %p60
        %p353 = pneg %p57
        %p354 = scmp.lt.s32.totalorder %s29, 0
        %s355 = scalar_select %p354, %s29, 0
        %s356 = smul.addr %s355, 8
        %s357 = scalar_lea.vmem %s2, %s356
        %p358 = pneg %p86
        %p359 = pneg %p83
        %p360 = pneg %p112
        %p361 = pneg %p109
        %p362 = pneg %p138
        %p363 = pneg %p135
        %p364 = pneg %p164
        %p365 = pneg %p161
        %p366 = scmp.lt.s32.totalorder %s29, 0
        %s367 = scalar_select %p366, %s29, 0
        %s368 = smul.addr %s367, 8
        %s369 = scalar_lea.vmem %s6, %s368
        %p370 = pneg %p190
        %p371 = pneg %p187
        %p372 = pneg %p216
        %p373 = pneg %p213
        %s374 = smul.u32 8, %s29
        %p375 = scmp.lt.s32.totalorder %s29, 0
        %s376 = scalar_select %p375, %s29, 0
        %s377 = smul.addr %s376, 8
        %s378 = scalar_lea.vmem %s2, %s377
        %p379 = scmp.lt.s32.totalorder %s29, 0
        %s380 = scalar_select %p379, %s29, 0
        %s381 = smul.addr %s380, 8
        %s382 = scalar_lea.vmem %s6, %s381
        %s383 = smul.u32 %s30, 8
        %s384 = sld [smem:[#allocation5 + %s29]]
        %p385 = scmp.lt.s32.totalorder %s383, %s384
        %p386 = scmp.eq.s32.totalorder %s30, 0
        %p387 = por %p385, %p386
        // Predicated region
        $region61: #{tpu_custom_call.1} parent=43 // pred_check
          %p388 = pneg %p387
        $region62: #{tpu_custom_call.1} parent=43 // pred_check_branch
          %390 = sbr.rel (%p388) target = $region64
        $region63: #{tpu_custom_call.1} parent=43 // pred_region
          %v391 = vld [vmem:[%s326] sm:$0xff]
          %v392 = vld [vmem:[%s326 + $0x8] sm:$0xff]
          %v393 = vld [vmem:[%s326 + $0x10] sm:$0xff]
          %v394 = vld [vmem:[%s326 + $0x18] sm:$0xff]
          %v395 = vld [vmem:[%s326 + $0x20] sm:$0xff]
          %v396 = vld [vmem:[%s326 + $0x28] sm:$0xff]
          %v397 = vld [vmem:[%s326 + $0x30] sm:$0xff]
          %v398 = vld [vmem:[%s326 + $0x38] sm:$0xff]
          %vm399 = vcmask 261120
          %v400 = vsel %vm399, %v391, -inf
          %401 = vmax.xlane.f32.xlu0 %v400
          %v402 = vpop.xlane.xlu0 %401
          %v403 = vsel %vm399, %v392, -inf
          %404 = vmax.xlane.f32.xlu0 %v403
          %v405 = vpop.xlane.xlu0 %404
          %v406 = vsel %vm399, %v393, -inf
          %407 = vmax.xlane.f32.xlu0 %v406
          %v408 = vpop.xlane.xlu0 %407
          %v409 = vsel %vm399, %v394, -inf
          %410 = vmax.xlane.f32.xlu0 %v409
          %v411 = vpop.xlane.xlu0 %410
          %v412 = vsel %vm399, %v395, -inf
          %413 = vmax.xlane.f32.xlu0 %v412
          %v414 = vpop.xlane.xlu0 %413
          %v415 = vsel %vm399, %v396, -inf
          %416 = vmax.xlane.f32.xlu0 %v415
          %v417 = vpop.xlane.xlu0 %416
          %v418 = vsel %vm399, %v397, -inf
          %419 = vmax.xlane.f32.xlu0 %v418
          %v420 = vpop.xlane.xlu0 %419
          %v421 = vsel %vm399, %v398, -inf
          %422 = vmax.xlane.f32.xlu0 %v421
          %v423 = vpop.xlane.xlu0 %422
          %v424 = vsub.f32 %v391, %v402
          %v425 = vsub.f32 %v392, %v405
          %v426 = vsub.f32 %v393, %v408
          %v427 = vsub.f32 %v394, %v411
          %v428 = vsub.f32 %v395, %v414
          %v429 = vsub.f32 %v396, %v417
          %v430 = vsub.f32 %v397, %v420
          %v431 = vsub.f32 %v398, %v423
          %v432 = vmul.f32 %v424, 1.442695
          %v433 = vpow.pop %v432
          %v434 = vmul.f32 %v425, 1.442695
          %v435 = vpow.pop %v434
          %v436 = vmul.f32 %v426, 1.442695
          %v437 = vpow.pop %v436
          %v438 = vmul.f32 %v427, 1.442695
          %v439 = vpow.pop %v438
          %v440 = vmul.f32 %v428, 1.442695
          %v441 = vpow.pop %v440
          %v442 = vmul.f32 %v429, 1.442695
          %v443 = vpow.pop %v442
          %v444 = vmul.f32 %v430, 1.442695
          %v445 = vpow.pop %v444
          %v446 = vmul.f32 %v431, 1.442695
          %v447 = vpow.pop %v446
          %v448 = vsel %vm399, %v433, 0.0
          %449 = vadd.xlane.f32.xlu0 %v448
          %v450 = vpop.xlane.xlu0 %449
          %v451 = vsel %vm399, %v435, 0.0
          %452 = vadd.xlane.f32.xlu0 %v451
          %v453 = vpop.xlane.xlu0 %452
          %v454 = vsel %vm399, %v437, 0.0
          %455 = vadd.xlane.f32.xlu0 %v454
          %v456 = vpop.xlane.xlu0 %455
          %v457 = vsel %vm399, %v439, 0.0
          %458 = vadd.xlane.f32.xlu0 %v457
          %v459 = vpop.xlane.xlu0 %458
          %v460 = vsel %vm399, %v441, 0.0
          %461 = vadd.xlane.f32.xlu0 %v460
          %v462 = vpop.xlane.xlu0 %461
          %v463 = vsel %vm399, %v443, 0.0
          %464 = vadd.xlane.f32.xlu0 %v463
          %v465 = vpop.xlane.xlu0 %464
          %v466 = vsel %vm399, %v445, 0.0
          %467 = vadd.xlane.f32.xlu0 %v466
          %v468 = vpop.xlane.xlu0 %467
          %v469 = vsel %vm399, %v447, 0.0
          %470 = vadd.xlane.f32.xlu0 %v469
          %v471 = vpop.xlane.xlu0 %470
          %v472 = vlog2.pop %v450
          %v473 = vmul.f32 %v472, 0.6931472
          %v474 = vlog2.pop %v453
          %v475 = vmul.f32 %v474, 0.6931472
          %v476 = vlog2.pop %v456
          %v477 = vmul.f32 %v476, 0.6931472
          %v478 = vlog2.pop %v459
          %v479 = vmul.f32 %v478, 0.6931472
          %v480 = vlog2.pop %v462
          %v481 = vmul.f32 %v480, 0.6931472
          %v482 = vlog2.pop %v465
          %v483 = vmul.f32 %v482, 0.6931472
          %v484 = vlog2.pop %v468
          %v485 = vmul.f32 %v484, 0.6931472
          %v486 = vlog2.pop %v471
          %v487 = vmul.f32 %v486, 0.6931472
          %v488 = vsub.f32 %v424, %v473
          %v489 = vsub.f32 %v425, %v475
          %v490 = vsub.f32 %v426, %v477
          %v491 = vsub.f32 %v427, %v479
          %v492 = vsub.f32 %v428, %v481
          %v493 = vsub.f32 %v429, %v483
          %v494 = vsub.f32 %v430, %v485
          %v495 = vsub.f32 %v431, %v487
          %v496 = vlaneseq
          %v497 = vshrl.u32 %v496, 7
          %v498 = vadd.s32 %v497, 8
          %v499 = vadd.s32 %v497, 16
          %v500 = vadd.s32 %v497, 24
          %v501 = vld [vmem:[%s378] sm:$0xff]
          %v502 = vrot.slane %v501, 1
          %v503 = vrot.slane %v501, 2
          %v504 = vrot.slane %v501, 3
          %v505 = vrot.slane %v501, 4
          %v506 = vrot.slane %v501, 5
          %v507 = vrot.slane %v501, 6
          %v508 = vrot.slane %v501, 7
          %v509 = vperm.slane %v501, 0
          %v510 = vperm.slane %v502, 0
          %v511 = vperm.slane %v503, 0
          %v512 = vperm.slane %v504, 0
          %v513 = vperm.slane %v505, 0
          %v514 = vperm.slane %v506, 0
          %v515 = vperm.slane %v507, 0
          %v516 = vperm.slane %v508, 0
          %vm517 = vcmp.eq.s32.totalorder %v497, %v509
          %vm518 = vcmp.eq.s32.totalorder %v498, %v509
          %vm519 = vcmp.eq.s32.totalorder %v499, %v509
          %vm520 = vcmp.eq.s32.totalorder %v500, %v509
          %vm521 = vcmp.eq.s32.totalorder %v497, %v510
          %vm522 = vcmp.eq.s32.totalorder %v498, %v510
          %vm523 = vcmp.eq.s32.totalorder %v499, %v510
          %vm524 = vcmp.eq.s32.totalorder %v500, %v510
          %vm525 = vcmp.eq.s32.totalorder %v497, %v511
          %vm526 = vcmp.eq.s32.totalorder %v498, %v511
          %vm527 = vcmp.eq.s32.totalorder %v499, %v511
          %vm528 = vcmp.eq.s32.totalorder %v500, %v511
          %vm529 = vcmp.eq.s32.totalorder %v497, %v512
          %vm530 = vcmp.eq.s32.totalorder %v498, %v512
          %vm531 = vcmp.eq.s32.totalorder %v499, %v512
          %vm532 = vcmp.eq.s32.totalorder %v500, %v512
          %vm533 = vcmp.eq.s32.totalorder %v497, %v513
          %vm534 = vcmp.eq.s32.totalorder %v498, %v513
          %vm535 = vcmp.eq.s32.totalorder %v499, %v513
          %vm536 = vcmp.eq.s32.totalorder %v500, %v513
          %vm537 = vcmp.eq.s32.totalorder %v497, %v514
          %vm538 = vcmp.eq.s32.totalorder %v498, %v514
          %vm539 = vcmp.eq.s32.totalorder %v499, %v514
          %vm540 = vcmp.eq.s32.totalorder %v500, %v514
          %vm541 = vcmp.eq.s32.totalorder %v497, %v515
          %vm542 = vcmp.eq.s32.totalorder %v498, %v515
          %vm543 = vcmp.eq.s32.totalorder %v499, %v515
          %vm544 = vcmp.eq.s32.totalorder %v500, %v515
          %vm545 = vcmp.eq.s32.totalorder %v497, %v516
          %vm546 = vcmp.eq.s32.totalorder %v498, %v516
          %vm547 = vcmp.eq.s32.totalorder %v499, %v516
          %vm548 = vcmp.eq.s32.totalorder %v500, %v516
          %v549 = vsel %vm517, 1, 0
          %v550 = vsel %vm518, 1, 0
          %v551 = vsel %vm519, 1, 0
          %v552 = vsel %vm520, 1, 0
          %v553 = vsel %vm521, 1, 0
          %v554 = vsel %vm522, 1, 0
          %v555 = vsel %vm523, 1, 0
          %v556 = vsel %vm524, 1, 0
          %v557 = vsel %vm525, 1, 0
          %v558 = vsel %vm526, 1, 0
          %v559 = vsel %vm527, 1, 0
          %v560 = vsel %vm528, 1, 0
          %v561 = vsel %vm529, 1, 0
          %v562 = vsel %vm530, 1, 0
          %v563 = vsel %vm531, 1, 0
          %v564 = vsel %vm532, 1, 0
          %v565 = vsel %vm533, 1, 0
          %v566 = vsel %vm534, 1, 0
          %v567 = vsel %vm535, 1, 0
          %v568 = vsel %vm536, 1, 0
          %v569 = vsel %vm537, 1, 0
          %v570 = vsel %vm538, 1, 0
          %v571 = vsel %vm539, 1, 0
          %v572 = vsel %vm540, 1, 0
          %v573 = vsel %vm541, 1, 0
          %v574 = vsel %vm542, 1, 0
          %v575 = vsel %vm543, 1, 0
          %v576 = vsel %vm544, 1, 0
          %v577 = vsel %vm545, 1, 0
          %v578 = vsel %vm546, 1, 0
          %v579 = vsel %vm547, 1, 0
          %v580 = vsel %vm548, 1, 0
          %v581 = vcvt.s32.f32 %v549
          %v582 = vcvt.s32.f32 %v550
          %v583 = vcvt.s32.f32 %v551
          %v584 = vcvt.s32.f32 %v552
          %v585 = vcvt.s32.f32 %v553
          %v586 = vcvt.s32.f32 %v554
          %v587 = vcvt.s32.f32 %v555
          %v588 = vcvt.s32.f32 %v556
          %v589 = vcvt.s32.f32 %v557
          %v590 = vcvt.s32.f32 %v558
          %v591 = vcvt.s32.f32 %v559
          %v592 = vcvt.s32.f32 %v560
          %v593 = vcvt.s32.f32 %v561
          %v594 = vcvt.s32.f32 %v562
          %v595 = vcvt.s32.f32 %v563
          %v596 = vcvt.s32.f32 %v564
          %v597 = vcvt.s32.f32 %v565
          %v598 = vcvt.s32.f32 %v566
          %v599 = vcvt.s32.f32 %v567
          %v600 = vcvt.s32.f32 %v568
          %v601 = vcvt.s32.f32 %v569
          %v602 = vcvt.s32.f32 %v570
          %v603 = vcvt.s32.f32 %v571
          %v604 = vcvt.s32.f32 %v572
          %v605 = vcvt.s32.f32 %v573
          %v606 = vcvt.s32.f32 %v574
          %v607 = vcvt.s32.f32 %v575
          %v608 = vcvt.s32.f32 %v576
          %v609 = vcvt.s32.f32 %v577
          %v610 = vcvt.s32.f32 %v578
          %v611 = vcvt.s32.f32 %v579
          %v612 = vcvt.s32.f32 %v580
          %v614 = vsel %vm399, %v488, 0
          %616 = vmatpush.msra.mxu0 0.0
          %617 = vmatpush.msra.mxu0 0.0
          %618 = vmatpush.msra.mxu0 0.0
          %619 = vmatpush.msra.mxu0 0.0
          %620 = vmatpush.msra.mxu0 0.0
          %621 = vmatpush.msra.mxu0 0.0
          %622 = vmatpush.msra.mxu0 0.0
          %623 = vmatpush.msra.mxu0 0.0
          %624 = vmatpush.msra.mxu0 0.0
          %625 = vmatpush.msra.mxu0 0.0
          %626 = vmatpush.msra.mxu0 0.0
          %627 = vmatpush.msra.mxu0 0.0
          %628 = vmatpush.msra.mxu0 %v584
          %629 = vmatpush.msra.mxu0 %v583
          %630 = vmatpush.msra.mxu0 %v582
          %631 = vmatpush.msra.mxu0 %v581
          %632 = vmatmul.f32.gmra.mxu0 %v614
          %v633 = vpop.f32.mrf.mxu0
          %v634 = vadd.f32 0.0, %v633
          %635 = vdwg.mxu0
          %v637 = vsel %vm399, %v489, 0
          %639 = vmatpush.msra.mxu0 0.0
          %640 = vmatpush.msra.mxu0 0.0
          %641 = vmatpush.msra.mxu0 0.0
          %642 = vmatpush.msra.mxu0 0.0
          %643 = vmatpush.msra.mxu0 0.0
          %644 = vmatpush.msra.mxu0 0.0
          %645 = vmatpush.msra.mxu0 0.0
          %646 = vmatpush.msra.mxu0 0.0
          %647 = vmatpush.msra.mxu0 0.0
          %648 = vmatpush.msra.mxu0 0.0
          %649 = vmatpush.msra.mxu0 0.0
          %650 = vmatpush.msra.mxu0 0.0
          %651 = vmatpush.msra.mxu0 %v588
          %652 = vmatpush.msra.mxu0 %v587
          %653 = vmatpush.msra.mxu0 %v586
          %654 = vmatpush.msra.mxu0 %v585
          %655 = vmatmul.f32.gmra.mxu0 %v637
          %v656 = vpop.f32.mrf.mxu0
          %v657 = vadd.f32 0.0, %v656
          %658 = vdwg.mxu0
          %v660 = vsel %vm399, %v490, 0
          %662 = vmatpush.msra.mxu0 0.0
          %663 = vmatpush.msra.mxu0 0.0
          %664 = vmatpush.msra.mxu0 0.0
          %665 = vmatpush.msra.mxu0 0.0
          %666 = vmatpush.msra.mxu0 0.0
          %667 = vmatpush.msra.mxu0 0.0
          %668 = vmatpush.msra.mxu0 0.0
          %669 = vmatpush.msra.mxu0 0.0
          %670 = vmatpush.msra.mxu0 0.0
          %671 = vmatpush.msra.mxu0 0.0
          %672 = vmatpush.msra.mxu0 0.0
          %673 = vmatpush.msra.mxu0 0.0
          %674 = vmatpush.msra.mxu0 %v592
          %675 = vmatpush.msra.mxu0 %v591
          %676 = vmatpush.msra.mxu0 %v590
          %677 = vmatpush.msra.mxu0 %v589
          %678 = vmatmul.f32.gmra.mxu0 %v660
          %v679 = vpop.f32.mrf.mxu0
          %v680 = vadd.f32 0.0, %v679
          %681 = vdwg.mxu0
          %v683 = vsel %vm399, %v491, 0
          %685 = vmatpush.msra.mxu0 0.0
          %686 = vmatpush.msra.mxu0 0.0
          %687 = vmatpush.msra.mxu0 0.0
          %688 = vmatpush.msra.mxu0 0.0
          %689 = vmatpush.msra.mxu0 0.0
          %690 = vmatpush.msra.mxu0 0.0
          %691 = vmatpush.msra.mxu0 0.0
          %692 = vmatpush.msra.mxu0 0.0
          %693 = vmatpush.msra.mxu0 0.0
          %694 = vmatpush.msra.mxu0 0.0
          %695 = vmatpush.msra.mxu0 0.0
          %696 = vmatpush.msra.mxu0 0.0
          %697 = vmatpush.msra.mxu0 %v596
          %698 = vmatpush.msra.mxu0 %v595
          %699 = vmatpush.msra.mxu0 %v594
          %700 = vmatpush.msra.mxu0 %v593
          %701 = vmatmul.f32.gmra.mxu0 %v683
          %v702 = vpop.f32.mrf.mxu0
          %v703 = vadd.f32 0.0, %v702
          %704 = vdwg.mxu0
          %v706 = vsel %vm399, %v492, 0
          %708 = vmatpush.msra.mxu0 0.0
          %709 = vmatpush.msra.mxu0 0.0
          %710 = vmatpush.msra.mxu0 0.0
          %711 = vmatpush.msra.mxu0 0.0
          %712 = vmatpush.msra.mxu0 0.0
          %713 = vmatpush.msra.mxu0 0.0
          %714 = vmatpush.msra.mxu0 0.0
          %715 = vmatpush.msra.mxu0 0.0
          %716 = vmatpush.msra.mxu0 0.0
          %717 = vmatpush.msra.mxu0 0.0
          %718 = vmatpush.msra.mxu0 0.0
          %719 = vmatpush.msra.mxu0 0.0
          %720 = vmatpush.msra.mxu0 %v600
          %721 = vmatpush.msra.mxu0 %v599
          %722 = vmatpush.msra.mxu0 %v598
          %723 = vmatpush.msra.mxu0 %v597
          %724 = vmatmul.f32.gmra.mxu0 %v706
          %v725 = vpop.f32.mrf.mxu0
          %v726 = vadd.f32 0.0, %v725
          %727 = vdwg.mxu0
          %v729 = vsel %vm399, %v493, 0
          %731 = vmatpush.msra.mxu0 0.0
          %732 = vmatpush.msra.mxu0 0.0
          %733 = vmatpush.msra.mxu0 0.0
          %734 = vmatpush.msra.mxu0 0.0
          %735 = vmatpush.msra.mxu0 0.0
          %736 = vmatpush.msra.mxu0 0.0
          %737 = vmatpush.msra.mxu0 0.0
          %738 = vmatpush.msra.mxu0 0.0
          %739 = vmatpush.msra.mxu0 0.0
          %740 = vmatpush.msra.mxu0 0.0
          %741 = vmatpush.msra.mxu0 0.0
          %742 = vmatpush.msra.mxu0 0.0
          %743 = vmatpush.msra.mxu0 %v604
          %744 = vmatpush.msra.mxu0 %v603
          %745 = vmatpush.msra.mxu0 %v602
          %746 = vmatpush.msra.mxu0 %v601
          %747 = vmatmul.f32.gmra.mxu0 %v729
          %v748 = vpop.f32.mrf.mxu0
          %v749 = vadd.f32 0.0, %v748
          %750 = vdwg.mxu0
          %v752 = vsel %vm399, %v494, 0
          %754 = vmatpush.msra.mxu0 0.0
          %755 = vmatpush.msra.mxu0 0.0
          %756 = vmatpush.msra.mxu0 0.0
          %757 = vmatpush.msra.mxu0 0.0
          %758 = vmatpush.msra.mxu0 0.0
          %759 = vmatpush.msra.mxu0 0.0
          %760 = vmatpush.msra.mxu0 0.0
          %761 = vmatpush.msra.mxu0 0.0
          %762 = vmatpush.msra.mxu0 0.0
          %763 = vmatpush.msra.mxu0 0.0
          %764 = vmatpush.msra.mxu0 0.0
          %765 = vmatpush.msra.mxu0 0.0
          %766 = vmatpush.msra.mxu0 %v608
          %767 = vmatpush.msra.mxu0 %v607
          %768 = vmatpush.msra.mxu0 %v606
          %769 = vmatpush.msra.mxu0 %v605
          %770 = vmatmul.f32.gmra.mxu0 %v752
          %v771 = vpop.f32.mrf.mxu0
          %v772 = vadd.f32 0.0, %v771
          %773 = vdwg.mxu0
          %v775 = vsel %vm399, %v495, 0
          %777 = vmatpush.msra.mxu0 0.0
          %778 = vmatpush.msra.mxu0 0.0
          %779 = vmatpush.msra.mxu0 0.0
          %780 = vmatpush.msra.mxu0 0.0
          %781 = vmatpush.msra.mxu0 0.0
          %782 = vmatpush.msra.mxu0 0.0
          %783 = vmatpush.msra.mxu0 0.0
          %784 = vmatpush.msra.mxu0 0.0
          %785 = vmatpush.msra.mxu0 0.0
          %786 = vmatpush.msra.mxu0 0.0
          %787 = vmatpush.msra.mxu0 0.0
          %788 = vmatpush.msra.mxu0 0.0
          %789 = vmatpush.msra.mxu0 %v612
          %790 = vmatpush.msra.mxu0 %v611
          %791 = vmatpush.msra.mxu0 %v610
          %792 = vmatpush.msra.mxu0 %v609
          %793 = vmatmul.f32.gmra.mxu0 %v775
          %v794 = vpop.f32.mrf.mxu0
          %v795 = vadd.f32 0.0, %v794
          %796 = vdwg.mxu0
          %v797 = vrot.slane %v680, 4
          %vm798 = vcmask 1047556
          %v799 = vsel %vm798, %v797, %v634
          %v800 = vrot.slane %v634, 4
          %v801 = vsel %vm798, %v680, %v800
          %v803 = vunpack.c.l.s4 1983009808
          %v804 = vunpack.c.0.s8 %v803
          %v805 = vperm.slane %v799, %v804
          %v807 = vunpack.c.l.s4 1983009808
          %v808 = vunpack.c.0.s8 %v807
          %v809 = vperm.slane %v801, %v808
          %v810 = vrot.slane %v703, 4
          %v811 = vsel %vm798, %v810, %v657
          %v812 = vrot.slane %v657, 4
          %v813 = vsel %vm798, %v703, %v812
          %v815 = vunpack.c.l.s4 1983009808
          %v816 = vunpack.c.0.s8 %v815
          %v817 = vperm.slane %v811, %v816
          %v819 = vunpack.c.l.s4 1983009808
          %v820 = vunpack.c.0.s8 %v819
          %v821 = vperm.slane %v813, %v820
          %v822 = vrot.slane %v772, 4
          %v823 = vsel %vm798, %v822, %v726
          %v824 = vrot.slane %v726, 4
          %v825 = vsel %vm798, %v772, %v824
          %v827 = vunpack.c.l.s4 1983009808
          %v828 = vunpack.c.0.s8 %v827
          %v829 = vperm.slane %v823, %v828
          %v831 = vunpack.c.l.s4 1983009808
          %v832 = vunpack.c.0.s8 %v831
          %v833 = vperm.slane %v825, %v832
          %v834 = vrot.slane %v795, 4
          %v835 = vsel %vm798, %v834, %v749
          %v836 = vrot.slane %v749, 4
          %v837 = vsel %vm798, %v795, %v836
          %v839 = vunpack.c.l.s4 1983009808
          %v840 = vunpack.c.0.s8 %v839
          %v841 = vperm.slane %v835, %v840
          %v843 = vunpack.c.l.s4 1983009808
          %v844 = vunpack.c.0.s8 %v843
          %v845 = vperm.slane %v837, %v844
          %v846 = vrot.slane %v817, 4
          %v847 = vsel %vm798, %v846, %v805
          %v848 = vrot.slane %v805, 4
          %v849 = vsel %vm798, %v817, %v848
          %v851 = vunpack.c.l.s4 1934713408
          %v852 = vunpack.c.0.s8 %v851
          %v853 = vperm.slane %v847, %v852
          %v855 = vunpack.c.l.s4 1934713408
          %v856 = vunpack.c.0.s8 %v855
          %v857 = vperm.slane %v849, %v856
          %v858 = vrot.slane %v821, 4
          %v859 = vsel %vm798, %v858, %v809
          %v860 = vrot.slane %v809, 4
          %v861 = vsel %vm798, %v821, %v860
          %v863 = vunpack.c.l.s4 1934713408
          %v864 = vunpack.c.0.s8 %v863
          %v865 = vperm.slane %v859, %v864
          %v867 = vunpack.c.l.s4 1934713408
          %v868 = vunpack.c.0.s8 %v867
          %v869 = vperm.slane %v861, %v868
          %v870 = vrot.slane %v841, 4
          %v871 = vsel %vm798, %v870, %v829
          %v872 = vrot.slane %v829, 4
          %v873 = vsel %vm798, %v841, %v872
          %v875 = vunpack.c.l.s4 1934713408
          %v876 = vunpack.c.0.s8 %v875
          %v877 = vperm.slane %v871, %v876
          %v879 = vunpack.c.l.s4 1934713408
          %v880 = vunpack.c.0.s8 %v879
          %v881 = vperm.slane %v873, %v880
          %v882 = vrot.slane %v845, 4
          %v883 = vsel %vm798, %v882, %v833
          %v884 = vrot.slane %v833, 4
          %v885 = vsel %vm798, %v845, %v884
          %v887 = vunpack.c.l.s4 1934713408
          %v888 = vunpack.c.0.s8 %v887
          %v889 = vperm.slane %v883, %v888
          %v891 = vunpack.c.l.s4 1934713408
          %v892 = vunpack.c.0.s8 %v891
          %v893 = vperm.slane %v885, %v892
          %v894 = vrot.slane %v877, 4
          %v895 = vsel %vm798, %v894, %v853
          %v896 = vrot.slane %v853, 4
          %v897 = vsel %vm798, %v877, %v896
          %v898 = vrot.slane %v881, 4
          %v899 = vsel %vm798, %v898, %v857
          %v900 = vrot.slane %v857, 4
          %v901 = vsel %vm798, %v881, %v900
          %v902 = vrot.slane %v889, 4
          %v903 = vsel %vm798, %v902, %v865
          %v904 = vrot.slane %v865, 4
          %v905 = vsel %vm798, %v889, %v904
          %v906 = vrot.slane %v893, 4
          %v907 = vsel %vm798, %v906, %v869
          %v908 = vrot.slane %v869, 4
          %v909 = vsel %vm798, %v893, %v908
          %910 = vst [vmem:[#allocation2] sm:$0xff] %v895
          %911 = vst [vmem:[#allocation2 + $0x8] sm:$0xff] %v897
          %912 = vst [vmem:[#allocation2 + $0x10] sm:$0xff] %v899
          %913 = vst [vmem:[#allocation2 + $0x18] sm:$0xff] %v901
          %914 = vst [vmem:[#allocation2 + $0x20] sm:$0xff] %v903
          %915 = vst [vmem:[#allocation2 + $0x28] sm:$0xff] %v905
          %916 = vst [vmem:[#allocation2 + $0x30] sm:$0xff] %v907
          %917 = vst [vmem:[#allocation2 + $0x38] sm:$0xff] %v909
        $region64: #{tpu_custom_call.1} parent=43 // pred_fallthru
          _
        %v918 = vld [vmem:[#allocation11] sm:$0xff]
        %v919 = vld [vmem:[%s382] sm:$0xff]
        %v920 = vlaneseq
        %v921 = vand.u32 %v920, 127
        %vm922 = vcmp.lt.s32.totalorder %v921, 1
        %vm923 = vcmp.lt.s32.totalorder %v921, 2
        // Predicated region
        $region65: #{tpu_custom_call.1} parent=43 // pred_check
          %p924 = pneg %p386
        $region66: #{tpu_custom_call.1} parent=43 // pred_check_branch
          %926 = sbr.rel (%p924) target = $region68
        $region67: #{tpu_custom_call.1} parent=43 // pred_region
          %v927 = vld [vmem:[#allocation2] sm:$0xff]
          %v928 = vld [vmem:[#allocation9] sm:$0xff]
          %v929 = vadd.f32 %v927, %v928
          %930 = vst [vmem:[#allocation3] sm:$0xff] %v929
        $region68: #{tpu_custom_call.1} parent=43 // pred_fallthru
          _
        %s931 = scalar_select %p386, 1, 0
        %s932 = ssub.s32 %s384, %s383
        %p933 = scmp.gt.s32.totalorder %s932, 0
        %s934 = scalar_select %p933, %s932, 0
        %p935 = scmp.lt.s32.totalorder %s934, 8
        %s936 = scalar_select %p935, %s934, 8
        %v937 = vld [vmem:[#allocation3] sm:$0xff]
        // While loop
        $region69: #{tpu_custom_call.1} parent=43 // loop_pre_header
          _
        $region70: #{tpu_custom_call.1} parent=43 // loop_header
          %s939 = sphi %s931, %s941
          %p940 = scmp.ge.s32.totalorder %s939, %s936
          %v944 = vphi %v937, %v980
        $region71: #{tpu_custom_call.1} parent=43 // loop_header_branch
          %943 = sbr.rel (%p940) target = $region75
        $region72: #{tpu_custom_call.1} parent=43 // loop_body
          %945 = vrot.lane.b32.xlu0 %v944, 1
          %v946 = vpop.permute.xlu0 %945
          %v947 = vsel %vm922, -1e+30, %v946
          %948 = vrot.lane.b32.xlu0 %v944, 2
          %v949 = vpop.permute.xlu0 %948
          %v950 = vsel %vm923, -1e+30, %v949
          %v951 = vadd.f32 %v950, %v918
          %v952 = vmax.f32 %v944, %v947
          %v953 = vmax.f32 %v952, %v951
          %v954 = vsub.f32 %v944, %v953
          %v955 = vmul.f32 %v954, 1.442695
          %v956 = vpow.pop %v955
          %v957 = vsub.f32 %v947, %v953
          %v958 = vmul.f32 %v957, 1.442695
          %v959 = vpow.pop %v958
          %v960 = vadd.f32 %v956, %v959
          %v961 = vsub.f32 %v951, %v953
          %v962 = vmul.f32 %v961, 1.442695
          %v963 = vpow.pop %v962
          %v964 = vadd.f32 %v960, %v963
          %v965 = vlog2.pop %v964
          %v966 = vmul.f32 %v965, 0.6931472
          %v967 = vadd.f32 %v953, %v966
          %s968 = smul.u32 %s939, 8
          %s969 = scalar_lea.vmem [#allocation2], %s968
          %v970 = vld [vmem:[%s969] sm:$0xff]
          %v971 = vadd.f32 %v970, %v967
          %s972 = sadd.s32 %s383, %s939
          %v973 = vstv %s972
          %vm974 = vcmp.lt.s32.totalorder %v973, %v919
          %v975 = vsel %vm974, 1, 0
          %976 = vset.pattern.permute.xlu0 0
          %977 = vperm.xlu0 %976, %v975
          %v978 = vpop.permute.xlu0 %977
          %vm979 = vcmp.eq.s32.totalorder %v978, 1
          %v980 = vsel %vm979, %v971, %v944
        $region73: #{tpu_custom_call.1} parent=43 // loop_footer
          %s941 = sadd.s32 %s939, 1
        $region74: #{tpu_custom_call.1} parent=43 // loop_footer_branch
          %938 = sbr.rel target = $region70
        $region75: #{tpu_custom_call.1} parent=43 // loop_exit
          _
        %981 = vst [vmem:[#allocation3] sm:$0xff] %v944
        %p982 = scmp.eq.s32.totalorder %s30, 1
        // Predicated region
        $region76: #{tpu_custom_call.1} parent=43 // pred_check
          %p983 = pneg %p982
        $region77: #{tpu_custom_call.1} parent=43 // pred_check_branch
          %985 = sbr.rel (%p983) target = $region79
        $region78: #{tpu_custom_call.1} parent=43 // pred_region
          %v986 = vld [vmem:[#allocation3] sm:$0xff]
          %v987 = vld [vmem:[#allocation12] sm:$0xff]
          %v988 = vadd.f32 %v986, %v987
          %989 = vmax.xlane.f32.xlu0 %v988
          %v990 = vpop.xlane.xlu0 %989
          %v991 = vsub.f32 %v988, %v990
          %v992 = vmul.f32 %v991, 1.442695
          %v993 = vpow.pop %v992
          %994 = vadd.xlane.f32.xlu0 %v993
          %v995 = vpop.xlane.xlu0 %994
          %v996 = vlog2.pop %v995
          %v997 = vmul.f32 %v996, 0.6931472
          %v998 = vadd.f32 %v990, %v997
          %v999 = vsub.f32 0.0, %v998
          %1000 = vst [vmem:[#allocation14] sm:$0xff] %v999
        $region79: #{tpu_custom_call.1} parent=43 // pred_fallthru
          _
        // Predicated region
        $region80: #{tpu_custom_call.1} parent=43 // pred_check
          %p1001 = pneg %p213
        $region81: #{tpu_custom_call.1} parent=43 // pred_check_branch
          %1003 = sbr.rel (%p1001) target = $region83
        $region82: #{tpu_custom_call.1} parent=43 // pred_region
          %1005 = vsyncadd [#allocation8], 0
          %s1006 = smul.addr %s29, 8
          %s1007 = scalar_lea.hbm %s7, %s1006
          %s1009 = sshll.u32 [#allocation14], 4
          %s1010 = int_to_ptr.vmem [resolvable:$true] %s1009
          %s1011 = sshll.u32 %s1007, 4
          %s1012 = int_to_ptr.hbm [resolvable:$true] %s1011
          %1014 = dma.vmem_to_hbm [thread:$0]  %s1010, 128, %s1012, [#allocation8]
        $region83: #{tpu_custom_call.1} parent=43 // pred_fallthru
          _
        // Predicated region
        $region84: #{tpu_custom_call.1} parent=43 // pred_check
          %p1015 = pneg %p213
        $region85: #{tpu_custom_call.1} parent=43 // pred_check_branch
          %1017 = sbr.rel (%p1015) target = $region87
        $region86: #{tpu_custom_call.1} parent=43 // pred_region
          %1019 = dma.done [#allocation8], 128
        $region87: #{tpu_custom_call.1} parent=43 // pred_fallthru
          _
      $region44: #{tpu_custom_call.1} parent=5 // pred_fallthru
        _
      %p1020 = scmp.le.s32.totalorder 2, %s20
      // Predicated region
      $region88: #{tpu_custom_call.1} parent=5 // pred_check
        %p1021 = pneg %p1020
      $region89: #{tpu_custom_call.1} parent=5 // pred_check_branch
        %1023 = sbr.rel (%p1021) target = $region91
      $region90: #{tpu_custom_call.1} parent=5 // pred_region
        %s1024 = ssub.s32 %s20, 2
      $region91: #{tpu_custom_call.1} parent=5 // pred_fallthru
        _
    $region6: #{tpu_custom_call.1} parent=1 // loop_footer
      %s24 = sadd.s32 1, %s20
    $region7: #{tpu_custom_call.1} parent=1 // loop_footer_branch
      %19 = sbr.rel target = $region3
    $region8: #{tpu_custom_call.1} parent=1 // loop_exit
      _
    %1025 = vsyncpa [#allocation7], 1
    %s1026 = scalar_lea.sflag [#allocation7], 1
    %1027 = vsyncpa %s1026, 1
    %1028 = vsyncpa [#allocation10], 1
    %1029 = vsyncpa [#allocation13], 1
    %1030 = vsyncpa [#allocation8], 1
    %s1031 = scalar_lea.sflag [#allocation8], 1
    %1032 = vsyncpa %s1031, 1

</llo_original>
